<compile_context>
chip_gen: v7x
topology: tpu7x:2x2x1
jax: 0.10.0
libtpu: 0.0.40
codegen_flags: <defaults>
</compile_context>

<pallas_src>
import functools

import jax
import jax.numpy as jnp
from jax.experimental import pallas as pl
from jax.experimental.pallas import tpu as pltpu

DROPOUT_RATE = 0.3
KEEP_PROB = 1.0 - DROPOUT_RATE
INV_KEEP = 1.0 / KEEP_PROB
# keep iff int31 uniform bits < KEEP_THRESHOLD  <=>  U[0,1) < KEEP_PROB
KEEP_THRESHOLD = int(KEEP_PROB * (1 << 31))

HIDDEN_LAYER_NODES_1 = 50
HIDDEN_LAYER_NODES_2 = 20
OUTPUT_DIMENSION = 2

OUT_PAD = 128            # lane-dense padded output width (multiple of 128)


def bnn_kernel(x_ref, w1_ref, b1_ref, w2_ref, b2_ref, w3d_ref, b3d_ref,
               bits1_ref, bits2_ref, o_ref, h1_rep, *, s_blk, batch):
    m_blk = s_blk * batch

    # ---- fc1 + relu: sample-invariant -> computed ONCE per grid step --------
    h1 = jnp.dot(x_ref[...], w1_ref[...],
                 preferred_element_type=jnp.float32) + b1_ref[...]
    h1 = jnp.maximum(h1, 0.0)                                   # (B, H1)

    # Replicate across this step's s_blk MC samples -> (s_blk*B, H1).
    # Static unrolled stores into VMEM scratch (covers the whole scratch).
    for i in range(s_blk):
        h1_rep[pl.ds(i * batch, batch), :] = h1
    h1t = h1_rep[...]                                           # (M, H1)

    # ---- dropout 1 (1/keep rescale folded into w2 in the wrapper) -----------
    h1d = jnp.where(bits1_ref[...] < KEEP_THRESHOLD, h1t, 0.0)

    # ---- fc2 + relu: one (M, H1) @ (H1, H2) matmul ---------------------------
    h2 = jnp.dot(h1d, w2_ref[...],
                 preferred_element_type=jnp.float32) + b2_ref[...]
    h2 = jnp.maximum(h2, 0.0)                                   # (M, H2)

    # ---- dropout 2 (rescale folded into the w3 difference) ------------------
    h2d = jnp.where(bits2_ref[...] < KEEP_THRESHOLD, h2, 0.0)

    # ---- fc3 + 2-way softmax == sigmoid of the logit difference -------------
    # d = logit1 - logit0 ; p1 = sigmoid(d) ; p0 = 1 - p1 (exact for 2 classes;
    # exp over/underflow saturates to 0/1 cleanly, no NaN).
    d = jnp.sum(h2d * w3d_ref[...], axis=-1, keepdims=True) + b3d_ref[...]   # (M,1)
    p1 = pl.reciprocal(1.0 + jnp.exp(-d))     # exact reciprocal (keeps 1e-5 check)
    p0 = 1.0 - p1

    # Lane-dense store: lane 0 = p0, lane 1 = p1, lanes >=2 hold p1 (discarded).
    lane = jax.lax.broadcasted_iota(jnp.int32, (m_blk, OUT_PAD), 1)
    o_ref[...] = jnp.where(lane == 0, p0, p1)


def init_params(key, input_dim):
    """Deterministic init mimicking nn.Linear's U(-1/sqrt(fan_in), 1/sqrt(fan_in))."""
    dims = [(input_dim, HIDDEN_LAYER_NODES_1),
            (HIDDEN_LAYER_NODES_1, HIDDEN_LAYER_NODES_2),
            (HIDDEN_LAYER_NODES_2, OUTPUT_DIMENSION)]
    params = []
    for fan_in, fan_out in dims:
        key, kw, kb = jax.random.split(key, 3)
        bound = 1.0 / (fan_in ** 0.5)
        w = jax.random.uniform(kw, (fan_in, fan_out), jnp.float32, -bound, bound)
        b = jax.random.uniform(kb, (1, fan_out), jnp.float32, -bound, bound)
        params += [w, b]
    return tuple(params)


def make_dropout_bits(key, num_samples, batch):
    """Fresh dropout entropy per MC sample: int32 uniform in [0, 2**31)."""
    k1, k2 = jax.random.split(key)
    b1 = (jax.random.bits(k1, (num_samples, batch, HIDDEN_LAYER_NODES_1),
                          dtype=jnp.uint32) >> 1).astype(jnp.int32)
    b2 = (jax.random.bits(k2, (num_samples, batch, HIDDEN_LAYER_NODES_2),
                          dtype=jnp.uint32) >> 1).astype(jnp.int32)
    return b1, b2


def bnn_forward_mc(xs, params, bits1, bits2):
    """Monte-Carlo dropout forward: (num_samples, batch, OUTPUT_DIMENSION)."""
    assert len(xs) == 2, "forward() expects two chunks to concatenate"
    x = jnp.concatenate([a.astype(jnp.float32) for a in xs], axis=1)  # one-time op
    batch, input_dim = x.shape
    num_samples = bits1.shape[0]
    w1, b1, w2, b2, w3, b3 = params

    # One-time wrapper prep (amortized over all samples):
    #   * fold the 1/keep dropout rescale into w2 and into the w3 difference,
    #   * reduce the 2-class fc3+softmax to a weight/bias difference (sigmoid).
    w2s = w2 * INV_KEEP
    w3d = ((w3[:, 1] - w3[:, 0]) * INV_KEEP).reshape(1, HIDDEN_LAYER_NODES_2)
    b3d = (b3[:, 1] - b3[:, 0]).reshape(1, 1)

    # Batch the MC samples into the matmul M-dimension.
    bits1_f = bits1.reshape(num_samples * batch, HIDDEN_LAYER_NODES_1)
    bits2_f = bits2.reshape(num_samples * batch, HIDDEN_LAYER_NODES_2)

    # 2 "parallel" steps (halves the samples per TensorCore on v7x); 1 otherwise.
    n_blocks = 2 if (num_samples % 2 == 0 and num_samples >= 2) else 1
    s_blk = num_samples // n_blocks
    m_blk = s_blk * batch
    assert m_blk % 8 == 0, "samples-per-step * batch must be a multiple of 8"

    const = lambda s: (0, 0)        # weights / input: resident across the grid
    per_blk = lambda s: (s, 0)      # one slab of samples per step

    out = pl.pallas_call(
        functools.partial(bnn_kernel, s_blk=s_blk, batch=batch),
        out_shape=jax.ShapeDtypeStruct((num_samples * batch, OUT_PAD), jnp.float32),
        grid_spec=pltpu.PrefetchScalarGridSpec(
            num_scalar_prefetch=0,
            grid=(n_blocks,),
            in_specs=[
                pl.BlockSpec((batch, input_dim), const),                # x (concat)
                pl.BlockSpec(w1.shape, const),                          # w1
                pl.BlockSpec(b1.shape, const),                          # b1
                pl.BlockSpec(w2s.shape, const),                         # w2 / keep
                pl.BlockSpec(b2.shape, const),                          # b2
                pl.BlockSpec(w3d.shape, const),                         # w3 diff / keep
                pl.BlockSpec(b3d.shape, const),                         # b3 diff
                pl.BlockSpec((m_blk, HIDDEN_LAYER_NODES_1), per_blk),   # bits1 slab
                pl.BlockSpec((m_blk, HIDDEN_LAYER_NODES_2), per_blk),   # bits2 slab
            ],
            out_specs=pl.BlockSpec((m_blk, OUT_PAD), per_blk),
            scratch_shapes=[pltpu.VMEM((m_blk, HIDDEN_LAYER_NODES_1), jnp.float32)],
        ),
        compiler_params=pltpu.CompilerParams(
            dimension_semantics=("parallel",)),
    )(x, w1, b1, w2s, b2, w3d, b3d, bits1_f, bits2_f)

    return out[:, :OUTPUT_DIMENSION].reshape(num_samples, batch, OUTPUT_DIMENSION)


def bnn_reference(xs, params, bits1, bits2):
    """Pure-JAX reference with the SAME dropout masks (for correctness check)."""
    x = jnp.concatenate([a.astype(jnp.float32) for a in xs], axis=1)
    w1, b1, w2, b2, w3, b3 = params
    keep1 = (bits1 < KEEP_THRESHOLD).astype(jnp.float32)
    keep2 = (bits2 < KEEP_THRESHOLD).astype(jnp.float32)
    h = jnp.maximum(x @ w1 + b1, 0.0)                   # (B, H1)
    h = h[None, :, :] * keep1 * INV_KEEP                # (S, B, H1)
    h = jnp.maximum(jnp.einsum("sbh,hk->sbk", h, w2) + b2, 0.0)
    h = h * keep2 * INV_KEEP
    logits = jnp.einsum("sbh,hk->sbk", h, w3) + b3
    return jax.nn.softmax(logits, axis=-1)


if __name__ == "__main__":
    key = jax.random.PRNGKey(0)
    k0, k1, kp, kd = jax.random.split(key, 4)

    # forward() receives a list of tensors concatenated along dim=1:
    # two chunks of (batch=8, 16) -> input_dim = 32; 16 MC-dropout samples.
    batch, chunk, num_samples = 8, 16, 16
    x_list = [jax.random.normal(k0, (batch, chunk), jnp.float32),
              jax.random.normal(k1, (batch, chunk), jnp.float32)]
    input_dim = chunk * len(x_list)

    params = init_params(kp, input_dim)
    bits1, bits2 = make_dropout_bits(kd, num_samples, batch)

    out = bnn_forward_mc(x_list, params, bits1, bits2)
    out = jax.block_until_ready(out)

    assert out.shape == (num_samples, batch, OUTPUT_DIMENSION)
    # softmax rows must sum to 1
    assert bool(jnp.allclose(jnp.sum(out, axis=-1), 1.0, atol=1e-5))
    # exact-mask reference check
    ref = bnn_reference(x_list, params, bits1, bits2)
    assert bool(jnp.allclose(out, ref, atol=1e-5, rtol=1e-5))

    print("KERNEL_OK")
</pallas_src>

<mosaic_0001>
module attributes {stable_mosaic.version = 11 : i64} {
  func.func @bnn_kernel(%arg0: i32, %arg1: memref<8x32xf32, #tpu.memory_space<vmem>>, %arg2: memref<32x50xf32, #tpu.memory_space<vmem>>, %arg3: memref<1x50xf32, #tpu.memory_space<vmem>>, %arg4: memref<50x20xf32, #tpu.memory_space<vmem>>, %arg5: memref<1x20xf32, #tpu.memory_space<vmem>>, %arg6: memref<1x20xf32, #tpu.memory_space<vmem>>, %arg7: memref<1x1xf32, #tpu.memory_space<vmem>>, %arg8: memref<64x50xi32, #tpu.memory_space<vmem>>, %arg9: memref<64x20xi32, #tpu.memory_space<vmem>>, %arg10: memref<64x128xf32, #tpu.memory_space<vmem>>, %arg11: memref<64x50xf32, #tpu.memory_space<vmem>>) attributes {dimension_semantics = [#tpu.dimension_semantics<parallel>], iteration_bounds = array<i64: 2>, scalar_prefetch = 0 : i64, scratch_operands = 1 : i64, tpu.core_type = #tpu.core_type<tc>, window_params = [{pipeline_mode = #tpu.pipeline_mode<synchronous>, transform_indices = @transform_0, window_bounds = array<i64: 8, 32>}, {pipeline_mode = #tpu.pipeline_mode<synchronous>, transform_indices = @transform_1, window_bounds = array<i64: 32, 50>}, {pipeline_mode = #tpu.pipeline_mode<synchronous>, transform_indices = @transform_2, window_bounds = array<i64: 1, 50>}, {pipeline_mode = #tpu.pipeline_mode<synchronous>, transform_indices = @transform_3, window_bounds = array<i64: 50, 20>}, {pipeline_mode = #tpu.pipeline_mode<synchronous>, transform_indices = @transform_4, window_bounds = array<i64: 1, 20>}, {pipeline_mode = #tpu.pipeline_mode<synchronous>, transform_indices = @transform_5, window_bounds = array<i64: 1, 20>}, {pipeline_mode = #tpu.pipeline_mode<synchronous>, transform_indices = @transform_6, window_bounds = array<i64: 1, 1>}, {transform_indices = @transform_7, window_bounds = array<i64: 64, 50>}, {transform_indices = @transform_8, window_bounds = array<i64: 64, 20>}, {transform_indices = @transform_9, window_bounds = array<i64: 64, 128>}]} {
    %c0 = arith.constant 0 : index
    %c0_0 = arith.constant 0 : index
    %0 = vector.load %arg1[%c0, %c0_0] : memref<8x32xf32, #tpu.memory_space<vmem>>, vector<8x32xf32>
    %c0_1 = arith.constant 0 : index
    %c0_2 = arith.constant 0 : index
    %1 = vector.load %arg2[%c0_1, %c0_2] : memref<32x50xf32, #tpu.memory_space<vmem>>, vector<32x50xf32>
    %cst = arith.constant dense<0.000000e+00> : vector<8x50xf32>
    %2 = tpu.matmul %0, %1, %cst {dimension_numbers = #tpu.dot_dimension_numbers<[1], [0], [0], [1], [0, 0, 1, 1], [], []>} : vector<8x32xf32>, vector<32x50xf32>, vector<8x50xf32> -> vector<8x50xf32>
    %c0_3 = arith.constant 0 : index
    %c0_4 = arith.constant 0 : index
    %3 = vector.load %arg3[%c0_3, %c0_4] : memref<1x50xf32, #tpu.memory_space<vmem>>, vector<1x50xf32>
    %4 = vector.broadcast %3 : vector<1x50xf32> to vector<8x50xf32>
    %5 = arith.addf %2, %4 : vector<8x50xf32>
    %cst_5 = arith.constant 0.000000e+00 : f32
    %6 = vector.broadcast %cst_5 : f32 to vector<8x50xf32>
    %7 = arith.maximumf %5, %6 : vector<8x50xf32>
    %c0_6 = arith.constant 0 : index
    %c0_7 = arith.constant 0 : index
    %8 = vector.load %arg11[%c0_6, %c0_7] : memref<64x50xf32, #tpu.memory_space<vmem>>, vector<8x50xf32>
    tpu.vector_store %arg11[%c0_6, %c0_7], %7 {strides = array<i32>} : memref<64x50xf32, #tpu.memory_space<vmem>>, vector<8x50xf32>,
    %c8 = arith.constant 8 : index
    %c0_8 = arith.constant 0 : index
    %9 = vector.load %arg11[%c8, %c0_8] : memref<64x50xf32, #tpu.memory_space<vmem>>, vector<8x50xf32>
    tpu.vector_store %arg11[%c8, %c0_8], %7 {strides = array<i32>} : memref<64x50xf32, #tpu.memory_space<vmem>>, vector<8x50xf32>,
    %c16 = arith.constant 16 : index
    %c0_9 = arith.constant 0 : index
    %10 = vector.load %arg11[%c16, %c0_9] : memref<64x50xf32, #tpu.memory_space<vmem>>, vector<8x50xf32>
    tpu.vector_store %arg11[%c16, %c0_9], %7 {strides = array<i32>} : memref<64x50xf32, #tpu.memory_space<vmem>>, vector<8x50xf32>,
    %c24 = arith.constant 24 : index
    %c0_10 = arith.constant 0 : index
    %11 = vector.load %arg11[%c24, %c0_10] : memref<64x50xf32, #tpu.memory_space<vmem>>, vector<8x50xf32>
    tpu.vector_store %arg11[%c24, %c0_10], %7 {strides = array<i32>} : memref<64x50xf32, #tpu.memory_space<vmem>>, vector<8x50xf32>,
    %c32 = arith.constant 32 : index
    %c0_11 = arith.constant 0 : index
    %12 = vector.load %arg11[%c32, %c0_11] : memref<64x50xf32, #tpu.memory_space<vmem>>, vector<8x50xf32>
    tpu.vector_store %arg11[%c32, %c0_11], %7 {strides = array<i32>} : memref<64x50xf32, #tpu.memory_space<vmem>>, vector<8x50xf32>,
    %c40 = arith.constant 40 : index
    %c0_12 = arith.constant 0 : index
    %13 = vector.load %arg11[%c40, %c0_12] : memref<64x50xf32, #tpu.memory_space<vmem>>, vector<8x50xf32>
    tpu.vector_store %arg11[%c40, %c0_12], %7 {strides = array<i32>} : memref<64x50xf32, #tpu.memory_space<vmem>>, vector<8x50xf32>,
    %c48 = arith.constant 48 : index
    %c0_13 = arith.constant 0 : index
    %14 = vector.load %arg11[%c48, %c0_13] : memref<64x50xf32, #tpu.memory_space<vmem>>, vector<8x50xf32>
    tpu.vector_store %arg11[%c48, %c0_13], %7 {strides = array<i32>} : memref<64x50xf32, #tpu.memory_space<vmem>>, vector<8x50xf32>,
    %c56 = arith.constant 56 : index
    %c0_14 = arith.constant 0 : index
    %15 = vector.load %arg11[%c56, %c0_14] : memref<64x50xf32, #tpu.memory_space<vmem>>, vector<8x50xf32>
    tpu.vector_store %arg11[%c56, %c0_14], %7 {strides = array<i32>} : memref<64x50xf32, #tpu.memory_space<vmem>>, vector<8x50xf32>,
    %c0_15 = arith.constant 0 : index
    %c0_16 = arith.constant 0 : index
    %16 = vector.load %arg11[%c0_15, %c0_16] : memref<64x50xf32, #tpu.memory_space<vmem>>, vector<64x50xf32>
    %c0_17 = arith.constant 0 : index
    %c0_18 = arith.constant 0 : index
    %17 = vector.load %arg8[%c0_17, %c0_18] : memref<64x50xi32, #tpu.memory_space<vmem>>, vector<64x50xi32>
    %c1503238553_i32 = arith.constant 1503238553 : i32
    %18 = vector.broadcast %c1503238553_i32 : i32 to vector<64x50xi32>
    %19 = arith.cmpi slt, %17, %18 : vector<64x50xi32>
    %cst_19 = arith.constant 0.000000e+00 : f32
    %20 = vector.broadcast %cst_19 : f32 to vector<64x50xf32>
    %21 = arith.select %19, %16, %20 : vector<64x50xi1>, vector<64x50xf32>
    %c0_20 = arith.constant 0 : index
    %c0_21 = arith.constant 0 : index
    %22 = vector.load %arg4[%c0_20, %c0_21] : memref<50x20xf32, #tpu.memory_space<vmem>>, vector<50x20xf32>
    %cst_22 = arith.constant dense<0.000000e+00> : vector<64x20xf32>
    %23 = tpu.matmul %21, %22, %cst_22 {dimension_numbers = #tpu.dot_dimension_numbers<[1], [0], [0], [1], [0, 0, 1, 1], [], []>} : vector<64x50xf32>, vector<50x20xf32>, vector<64x20xf32> -> vector<64x20xf32>
    %c0_23 = arith.constant 0 : index
    %c0_24 = arith.constant 0 : index
    %24 = vector.load %arg5[%c0_23, %c0_24] : memref<1x20xf32, #tpu.memory_space<vmem>>, vector<1x20xf32>
    %25 = vector.broadcast %24 : vector<1x20xf32> to vector<64x20xf32>
    %26 = arith.addf %23, %25 : vector<64x20xf32>
    %cst_25 = arith.constant 0.000000e+00 : f32
    %27 = vector.broadcast %cst_25 : f32 to vector<64x20xf32>
    %28 = arith.maximumf %26, %27 : vector<64x20xf32>
    %c0_26 = arith.constant 0 : index
    %c0_27 = arith.constant 0 : index
    %29 = vector.load %arg9[%c0_26, %c0_27] : memref<64x20xi32, #tpu.memory_space<vmem>>, vector<64x20xi32>
    %c1503238553_i32_28 = arith.constant 1503238553 : i32
    %30 = vector.broadcast %c1503238553_i32_28 : i32 to vector<64x20xi32>
    %31 = arith.cmpi slt, %29, %30 : vector<64x20xi32>
    %cst_29 = arith.constant 0.000000e+00 : f32
    %32 = vector.broadcast %cst_29 : f32 to vector<64x20xf32>
    %33 = arith.select %31, %28, %32 : vector<64x20xi1>, vector<64x20xf32>
    %c0_30 = arith.constant 0 : index
    %c0_31 = arith.constant 0 : index
    %34 = vector.load %arg6[%c0_30, %c0_31] : memref<1x20xf32, #tpu.memory_space<vmem>>, vector<1x20xf32>
    %35 = vector.broadcast %34 : vector<1x20xf32> to vector<64x20xf32>
    %36 = arith.mulf %33, %35 : vector<64x20xf32>
    %cst_32 = arith.constant dense<0.000000e+00> : vector<64xf32>
    %37 = vector.multi_reduction <add>, %36, %cst_32 [1] : vector<64x20xf32> to vector<64xf32>
    %38 = vector.shape_cast %37 : vector<64xf32> to vector<64x1xf32>
    %c0_33 = arith.constant 0 : index
    %c0_34 = arith.constant 0 : index
    %39 = vector.load %arg7[%c0_33, %c0_34] : memref<1x1xf32, #tpu.memory_space<vmem>>, vector<1x1xf32>
    %40 = vector.broadcast %39 : vector<1x1xf32> to vector<64x1xf32>
    %41 = arith.addf %38, %40 : vector<64x1xf32>
    %cst_35 = arith.constant 0.000000e+00 : f32
    %42 = vector.broadcast %cst_35 : f32 to vector<64x1xf32>
    %43 = arith.subf %42, %41 : vector<64x1xf32>
    %44 = math.exp %43 : vector<64x1xf32>
    %cst_36 = arith.constant 1.000000e+00 : f32
    %45 = vector.broadcast %cst_36 : f32 to vector<64x1xf32>
    %46 = arith.addf %45, %44 : vector<64x1xf32>
    %47 = tpu.reciprocal %46 : vector<64x1xf32> -> vector<64x1xf32>
    %cst_37 = arith.constant 1.000000e+00 : f32
    %48 = vector.broadcast %cst_37 : f32 to vector<64x1xf32>
    %49 = arith.subf %48, %47 : vector<64x1xf32>
    %50 = tpu.iota {dimensions = array<i32: 1>} : vector<64x128xi32>
    %c0_i32 = arith.constant 0 : i32
    %51 = vector.broadcast %c0_i32 : i32 to vector<64x128xi32>
    %52 = arith.cmpi eq, %50, %51 : vector<64x128xi32>
    %53 = vector.shape_cast %49 : vector<64x1xf32> to vector<64x1xf32>
    %54 = vector.broadcast %53 : vector<64x1xf32> to vector<64x128xf32>
    %55 = vector.shape_cast %47 : vector<64x1xf32> to vector<64x1xf32>
    %56 = vector.broadcast %55 : vector<64x1xf32> to vector<64x128xf32>
    %57 = arith.select %52, %54, %56 : vector<64x128xi1>, vector<64x128xf32>
    %c0_38 = arith.constant 0 : index
    %c0_39 = arith.constant 0 : index
    %58 = vector.load %arg10[%c0_38, %c0_39] : memref<64x128xf32, #tpu.memory_space<vmem>>, vector<64x128xf32>
    tpu.vector_store %arg10[%c0_38, %c0_39], %57 {strides = array<i32>} : memref<64x128xf32, #tpu.memory_space<vmem>>, vector<64x128xf32>,
    return
  }
  func.func @transform_0(%arg0: i32) -> (i32, i32) {
    %c0_i32 = arith.constant 0 : i32
    %c0_i32_0 = arith.constant 0 : i32
    %c0_i32_1 = arith.constant 0 : i32
    return %c0_i32, %c0_i32_0 : i32, i32
  }
  func.func @transform_1(%arg0: i32) -> (i32, i32) {
    %c0_i32 = arith.constant 0 : i32
    %c0_i32_0 = arith.constant 0 : i32
    %c0_i32_1 = arith.constant 0 : i32
    return %c0_i32, %c0_i32_0 : i32, i32
  }
  func.func @transform_2(%arg0: i32) -> (i32, i32) {
    %c0_i32 = arith.constant 0 : i32
    %c0_i32_0 = arith.constant 0 : i32
    %c0_i32_1 = arith.constant 0 : i32
    return %c0_i32, %c0_i32_0 : i32, i32
  }
  func.func @transform_3(%arg0: i32) -> (i32, i32) {
    %c0_i32 = arith.constant 0 : i32
    %c0_i32_0 = arith.constant 0 : i32
    %c0_i32_1 = arith.constant 0 : i32
    return %c0_i32, %c0_i32_0 : i32, i32
  }
  func.func @transform_4(%arg0: i32) -> (i32, i32) {
    %c0_i32 = arith.constant 0 : i32
    %c0_i32_0 = arith.constant 0 : i32
    %c0_i32_1 = arith.constant 0 : i32
    return %c0_i32, %c0_i32_0 : i32, i32
  }
  func.func @transform_5(%arg0: i32) -> (i32, i32) {
    %c0_i32 = arith.constant 0 : i32
    %c0_i32_0 = arith.constant 0 : i32
    %c0_i32_1 = arith.constant 0 : i32
    return %c0_i32, %c0_i32_0 : i32, i32
  }
  func.func @transform_6(%arg0: i32) -> (i32, i32) {
    %c0_i32 = arith.constant 0 : i32
    %c0_i32_0 = arith.constant 0 : i32
    %c0_i32_1 = arith.constant 0 : i32
    return %c0_i32, %c0_i32_0 : i32, i32
  }
  func.func @transform_7(%arg0: i32) -> (i32, i32) {
    %c0_i32 = arith.constant 0 : i32
    %c0_i32_0 = arith.constant 0 : i32
    return %arg0, %c0_i32 : i32, i32
  }
  func.func @transform_8(%arg0: i32) -> (i32, i32) {
    %c0_i32 = arith.constant 0 : i32
    %c0_i32_0 = arith.constant 0 : i32
    return %arg0, %c0_i32 : i32, i32
  }
  func.func @transform_9(%arg0: i32) -> (i32, i32) {
    %c0_i32 = arith.constant 0 : i32
    %c0_i32_0 = arith.constant 0 : i32
    return %arg0, %c0_i32 : i32, i32
  }
}

</mosaic_0001>

<llo_original>
// kernel: tpu_custom_call.1
$region0: #{tpu_custom_call.1}
  #allocation0 [shape = 'u32[]', space=smem, size = 0x4, offset = 0x4, fixed_abs, tag = 'smem constant byte address 0x4 - core index']
  #allocation1 [shape = 'u32[144,128]{1,0:T(1,128)}', space=vmem, size = 0x12000, scoped, tag = 'internal scratch']
  #allocation2 [shape = 'f32[64,50]{1,0:T(8,128)}', space=vmem, size = 0x8000, scoped, tag = 'scratch operand']
  #allocation3 [shape = 'f32[1,1]{1,0:T(1,128)S(1)}', space=vmem, size = 0x200, scoped, tag = 'scoped memory for tpu_custom_call.1']
  %s0 = inlined_call_operand.vmem [shape: f32[8,32], index: 0, kind: input, shape index: {}]
  %s1 = inlined_call_operand.vmem [shape: f32[32,50], index: 1, kind: input, shape index: {}]
  %s2 = inlined_call_operand.vmem [shape: f32[1,50], index: 2, kind: input, shape index: {}]
  %s3 = inlined_call_operand.vmem [shape: f32[50,20], index: 3, kind: input, shape index: {}]
  %s4 = inlined_call_operand.vmem [shape: f32[1,20], index: 4, kind: input, shape index: {}]
  %s5 = inlined_call_operand.vmem [shape: f32[1,20], index: 5, kind: input, shape index: {}]
  %s6 = inlined_call_operand.<no memory space> [shape: f32[1,1], index: 6, kind: input, shape index: {}]
  %s7 = inlined_call_operand.vmem [shape: s32[128,50], index: 7, kind: input, shape index: {}]
  %s8 = inlined_call_operand.vmem [shape: s32[128,20], index: 8, kind: input, shape index: {}]
  %s9 = inlined_call_operand.hbm [shape: f32[128,128], index: 9, kind: output, shape index: {}]
  %s10 = sld [smem:[#allocation0]]
  $region69: #{tpu_custom_call.1} parent=0
    _
  %s12 = ssub.s32 1, %s10
  %s13 = scalar_select 0, %s12, %s10
  %v14 = vstv %s6
  %15 = vst [vmem:[#allocation3] sm:$0x1] %v14
  $region1: #{tpu_custom_call.1} parent=0
    #allocation4 [shape = 'u8[65536]{0}', space=vmem, size = 0x10000, scoped, tag = 'output window, operand 0']
    #allocation5 [shape = 's32[2]{0}', space=sflag, size = 0x8, scoped, tag = 'scoped memory for tpu_custom_call.1']
    %16 = vsyncpa [#allocation5], 0
    %s17 = scalar_lea.sflag [#allocation5], 1
    %18 = vsyncpa %s17, 0
    loop: start=0, step=1, limit=4
    $region2: #{tpu_custom_call.1} parent=1 // loop_pre_header
      _
    $region3: #{tpu_custom_call.1} parent=1 // loop_header
      %s20 = sphi 0, %s24
      %p21 = scmp.ge.s32.totalorder %s20, 4
      %s28 = sphi 0, %s28
      %s30 = sphi 0, %s28
      %s31 = sphi 0, %s30
      %s45 = sphi 0, %s31
      %s49 = sphi 0, %s49
      %s51 = sphi 0, %s49
      %s52 = sphi 0, %s51
      %s66 = sphi 0, %s52
      %s70 = sphi 0, %s70
      %s72 = sphi 0, %s70
      %s73 = sphi 0, %s72
      %s87 = sphi 0, %s73
      %s91 = sphi 0, %s91
      %s93 = sphi 0, %s91
      %s94 = sphi 0, %s93
      %s108 = sphi 0, %s94
      %s112 = sphi 0, %s112
      %s114 = sphi 0, %s112
      %s115 = sphi 0, %s114
      %s129 = sphi 0, %s115
      %s133 = sphi 0, %s133
      %s135 = sphi 0, %s133
      %s136 = sphi 0, %s135
      %s150 = sphi 0, %s136
      %s154 = sphi 0, %s154
      %s156 = sphi 0, %s154
      %s157 = sphi 0, %s156
      %s171 = sphi 0, %s157
      %s177 = sphi 0, %s179
      %s180 = sphi 0, %s177
      %s181 = sphi 0, %s180
      %s197 = sphi 0, %s181
      %s203 = sphi 0, %s205
      %s206 = sphi 0, %s203
      %s207 = sphi 0, %s206
      %s223 = sphi 0, %s207
      %s229 = sphi 0, %s231
      %s232 = sphi 0, %s229
      %s233 = sphi 0, %s232
      %s249 = sphi 0, %s233
    $region4: #{tpu_custom_call.1} parent=1 // loop_header_branch
      %23 = sbr.rel (%p21) target = $region8
    $region5: #{tpu_custom_call.1} parent=1 // loop_body
      %s25 = ssub.s32 %s20, 1
      %s26 = ssub.s32 %s20, 2
      %s27 = sadd.s32 %s20, 1
      %s29 = sadd.s32 %s28, 1
      %p32 = scmp.eq.s32.totalorder %s20, 1
      %p33 = scmp.ne.s32.totalorder %s28, %s30
      %p34 = scmp.eq.s32.totalorder %s20, 0
      %p35 = por %p33, %p34
      %p36 = scmp.ne.s32.totalorder %s28, %s30
      %p37 = scmp.eq.s32.totalorder %s25, 1
      %p38 = por %p36, %p37
      %p39 = scmp.ne.s32.totalorder %s30, %s31
      %p40 = scmp.eq.s32.totalorder %s25, 0
      %p41 = por %p39, %p40
      %p42 = scmp.ne.s32.totalorder %s30, %s31
      %p43 = scmp.eq.s32.totalorder %s26, 1
      %p44 = por %p42, %p43
      %p46 = scmp.ne.s32.totalorder %s31, %s45
      %p47 = scmp.eq.s32.totalorder %s26, 0
      %p48 = por %p46, %p47
      %s50 = sadd.s32 %s49, 1
      %p53 = scmp.eq.s32.totalorder %s20, 1
      %p54 = scmp.ne.s32.totalorder %s49, %s51
      %p55 = scmp.eq.s32.totalorder %s20, 0
      %p56 = por %p54, %p55
      %p57 = scmp.ne.s32.totalorder %s49, %s51
      %p58 = scmp.eq.s32.totalorder %s25, 1
      %p59 = por %p57, %p58
      %p60 = scmp.ne.s32.totalorder %s51, %s52
      %p61 = scmp.eq.s32.totalorder %s25, 0
      %p62 = por %p60, %p61
      %p63 = scmp.ne.s32.totalorder %s51, %s52
      %p64 = scmp.eq.s32.totalorder %s26, 1
      %p65 = por %p63, %p64
      %p67 = scmp.ne.s32.totalorder %s52, %s66
      %p68 = scmp.eq.s32.totalorder %s26, 0
      %p69 = por %p67, %p68
      %s71 = sadd.s32 %s70, 1
      %p74 = scmp.eq.s32.totalorder %s20, 1
      %p75 = scmp.ne.s32.totalorder %s70, %s72
      %p76 = scmp.eq.s32.totalorder %s20, 0
      %p77 = por %p75, %p76
      %p78 = scmp.ne.s32.totalorder %s70, %s72
      %p79 = scmp.eq.s32.totalorder %s25, 1
      %p80 = por %p78, %p79
      %p81 = scmp.ne.s32.totalorder %s72, %s73
      %p82 = scmp.eq.s32.totalorder %s25, 0
      %p83 = por %p81, %p82
      %p84 = scmp.ne.s32.totalorder %s72, %s73
      %p85 = scmp.eq.s32.totalorder %s26, 1
      %p86 = por %p84, %p85
      %p88 = scmp.ne.s32.totalorder %s73, %s87
      %p89 = scmp.eq.s32.totalorder %s26, 0
      %p90 = por %p88, %p89
      %s92 = sadd.s32 %s91, 1
      %p95 = scmp.eq.s32.totalorder %s20, 1
      %p96 = scmp.ne.s32.totalorder %s91, %s93
      %p97 = scmp.eq.s32.totalorder %s20, 0
      %p98 = por %p96, %p97
      %p99 = scmp.ne.s32.totalorder %s91, %s93
      %p100 = scmp.eq.s32.totalorder %s25, 1
      %p101 = por %p99, %p100
      %p102 = scmp.ne.s32.totalorder %s93, %s94
      %p103 = scmp.eq.s32.totalorder %s25, 0
      %p104 = por %p102, %p103
      %p105 = scmp.ne.s32.totalorder %s93, %s94
      %p106 = scmp.eq.s32.totalorder %s26, 1
      %p107 = por %p105, %p106
      %p109 = scmp.ne.s32.totalorder %s94, %s108
      %p110 = scmp.eq.s32.totalorder %s26, 0
      %p111 = por %p109, %p110
      %s113 = sadd.s32 %s112, 1
      %p116 = scmp.eq.s32.totalorder %s20, 1
      %p117 = scmp.ne.s32.totalorder %s112, %s114
      %p118 = scmp.eq.s32.totalorder %s20, 0
      %p119 = por %p117, %p118
      %p120 = scmp.ne.s32.totalorder %s112, %s114
      %p121 = scmp.eq.s32.totalorder %s25, 1
      %p122 = por %p120, %p121
      %p123 = scmp.ne.s32.totalorder %s114, %s115
      %p124 = scmp.eq.s32.totalorder %s25, 0
      %p125 = por %p123, %p124
      %p126 = scmp.ne.s32.totalorder %s114, %s115
      %p127 = scmp.eq.s32.totalorder %s26, 1
      %p128 = por %p126, %p127
      %p130 = scmp.ne.s32.totalorder %s115, %s129
      %p131 = scmp.eq.s32.totalorder %s26, 0
      %p132 = por %p130, %p131
      %s134 = sadd.s32 %s133, 1
      %p137 = scmp.eq.s32.totalorder %s20, 1
      %p138 = scmp.ne.s32.totalorder %s133, %s135
      %p139 = scmp.eq.s32.totalorder %s20, 0
      %p140 = por %p138, %p139
      %p141 = scmp.ne.s32.totalorder %s133, %s135
      %p142 = scmp.eq.s32.totalorder %s25, 1
      %p143 = por %p141, %p142
      %p144 = scmp.ne.s32.totalorder %s135, %s136
      %p145 = scmp.eq.s32.totalorder %s25, 0
      %p146 = por %p144, %p145
      %p147 = scmp.ne.s32.totalorder %s135, %s136
      %p148 = scmp.eq.s32.totalorder %s26, 1
      %p149 = por %p147, %p148
      %p151 = scmp.ne.s32.totalorder %s136, %s150
      %p152 = scmp.eq.s32.totalorder %s26, 0
      %p153 = por %p151, %p152
      %s155 = sadd.s32 %s154, 1
      %p158 = scmp.eq.s32.totalorder %s20, 1
      %p159 = scmp.ne.s32.totalorder %s154, %s156
      %p160 = scmp.eq.s32.totalorder %s20, 0
      %p161 = por %p159, %p160
      %p162 = scmp.ne.s32.totalorder %s154, %s156
      %p163 = scmp.eq.s32.totalorder %s25, 1
      %p164 = por %p162, %p163
      %p165 = scmp.ne.s32.totalorder %s156, %s157
      %p166 = scmp.eq.s32.totalorder %s25, 0
      %p167 = por %p165, %p166
      %p168 = scmp.ne.s32.totalorder %s156, %s157
      %p169 = scmp.eq.s32.totalorder %s26, 1
      %p170 = por %p168, %p169
      %p172 = scmp.ne.s32.totalorder %s157, %s171
      %p173 = scmp.eq.s32.totalorder %s26, 0
      %p174 = por %p172, %p173
      %s175 = ssub.s32 %s20, %s27
      %p176 = scmp.eq.s32.totalorder %s175, 0
      %s178 = sadd.s32 %s177, 1
      %s179 = scalar_select %p176, %s177, %s178
      %p182 = pneg %p176
      %p183 = scmp.eq.s32.totalorder %s20, 1
      %p184 = por %p182, %p183
      %p185 = scmp.ne.s32.totalorder %s177, %s180
      %p186 = scmp.eq.s32.totalorder %s20, 0
      %p187 = por %p185, %p186
      %p188 = scmp.ne.s32.totalorder %s177, %s180
      %p189 = scmp.eq.s32.totalorder %s25, 1
      %p190 = por %p188, %p189
      %p191 = scmp.ne.s32.totalorder %s180, %s181
      %p192 = scmp.eq.s32.totalorder %s25, 0
      %p193 = por %p191, %p192
      %p194 = scmp.ne.s32.totalorder %s180, %s181
      %p195 = scmp.eq.s32.totalorder %s26, 1
      %p196 = por %p194, %p195
      %p198 = scmp.ne.s32.totalorder %s181, %s197
      %p199 = scmp.eq.s32.totalorder %s26, 0
      %p200 = por %p198, %p199
      %s201 = ssub.s32 %s20, %s27
      %p202 = scmp.eq.s32.totalorder %s201, 0
      %s204 = sadd.s32 %s203, 1
      %s205 = scalar_select %p202, %s203, %s204
      %p208 = pneg %p202
      %p209 = scmp.eq.s32.totalorder %s20, 1
      %p210 = por %p208, %p209
      %p211 = scmp.ne.s32.totalorder %s203, %s206
      %p212 = scmp.eq.s32.totalorder %s20, 0
      %p213 = por %p211, %p212
      %p214 = scmp.ne.s32.totalorder %s203, %s206
      %p215 = scmp.eq.s32.totalorder %s25, 1
      %p216 = por %p214, %p215
      %p217 = scmp.ne.s32.totalorder %s206, %s207
      %p218 = scmp.eq.s32.totalorder %s25, 0
      %p219 = por %p217, %p218
      %p220 = scmp.ne.s32.totalorder %s206, %s207
      %p221 = scmp.eq.s32.totalorder %s26, 1
      %p222 = por %p220, %p221
      %p224 = scmp.ne.s32.totalorder %s207, %s223
      %p225 = scmp.eq.s32.totalorder %s26, 0
      %p226 = por %p224, %p225
      %s227 = ssub.s32 %s20, %s27
      %p228 = scmp.eq.s32.totalorder %s227, 0
      %s230 = sadd.s32 %s229, 1
      %s231 = scalar_select %p228, %s229, %s230
      %p234 = pneg %p228
      %p235 = scmp.eq.s32.totalorder %s20, 1
      %p236 = por %p234, %p235
      %p237 = scmp.ne.s32.totalorder %s229, %s232
      %p238 = scmp.eq.s32.totalorder %s20, 0
      %p239 = por %p237, %p238
      %p240 = scmp.ne.s32.totalorder %s229, %s232
      %p241 = scmp.eq.s32.totalorder %s25, 1
      %p242 = por %p240, %p241
      %p243 = scmp.ne.s32.totalorder %s232, %s233
      %p244 = scmp.eq.s32.totalorder %s25, 0
      %p245 = por %p243, %p244
      %p246 = scmp.ne.s32.totalorder %s232, %s233
      %p247 = scmp.eq.s32.totalorder %s26, 1
      %p248 = por %p246, %p247
      %p250 = scmp.ne.s32.totalorder %s233, %s249
      %p251 = scmp.eq.s32.totalorder %s26, 0
      %p252 = por %p250, %p251
      %p253 = scmp.le.s32.totalorder 1, %s20
      %p254 = scmp.lt.s32.totalorder %s20, 3
      %p255 = pnand %p253, %p254
      %p256 = pneg %p255
      // Predicated region
      $region9: #{tpu_custom_call.1} parent=5 // pred_check
        _
      $region10: #{tpu_custom_call.1} parent=5 // pred_check_branch
        %258 = sbr.rel (%p255) target = $region12
      $region11: #{tpu_custom_call.1} parent=5 // pred_region
        %s259 = ssub.s32 %s20, 1
        // Predicated region
        $region13: #{tpu_custom_call.1} parent=11 // pred_check
          %p260 = pneg %p41
        $region14: #{tpu_custom_call.1} parent=11 // pred_check_branch
          %262 = sbr.rel (%p260) target = $region16
        $region15: #{tpu_custom_call.1} parent=11 // pred_region
          _
        $region16: #{tpu_custom_call.1} parent=11 // pred_fallthru
          _
        // Predicated region
        $region17: #{tpu_custom_call.1} parent=11 // pred_check
          %p263 = pneg %p62
        $region18: #{tpu_custom_call.1} parent=11 // pred_check_branch
          %265 = sbr.rel (%p263) target = $region20
        $region19: #{tpu_custom_call.1} parent=11 // pred_region
          _
        $region20: #{tpu_custom_call.1} parent=11 // pred_fallthru
          _
        // Predicated region
        $region21: #{tpu_custom_call.1} parent=11 // pred_check
          %p266 = pneg %p83
        $region22: #{tpu_custom_call.1} parent=11 // pred_check_branch
          %268 = sbr.rel (%p266) target = $region24
        $region23: #{tpu_custom_call.1} parent=11 // pred_region
          _
        $region24: #{tpu_custom_call.1} parent=11 // pred_fallthru
          _
        // Predicated region
        $region25: #{tpu_custom_call.1} parent=11 // pred_check
          %p269 = pneg %p104
        $region26: #{tpu_custom_call.1} parent=11 // pred_check_branch
          %271 = sbr.rel (%p269) target = $region28
        $region27: #{tpu_custom_call.1} parent=11 // pred_region
          _
        $region28: #{tpu_custom_call.1} parent=11 // pred_fallthru
          _
        // Predicated region
        $region29: #{tpu_custom_call.1} parent=11 // pred_check
          %p272 = pneg %p125
        $region30: #{tpu_custom_call.1} parent=11 // pred_check_branch
          %274 = sbr.rel (%p272) target = $region32
        $region31: #{tpu_custom_call.1} parent=11 // pred_region
          _
        $region32: #{tpu_custom_call.1} parent=11 // pred_fallthru
          _
        // Predicated region
        $region33: #{tpu_custom_call.1} parent=11 // pred_check
          %p275 = pneg %p146
        $region34: #{tpu_custom_call.1} parent=11 // pred_check_branch
          %277 = sbr.rel (%p275) target = $region36
        $region35: #{tpu_custom_call.1} parent=11 // pred_region
          _
        $region36: #{tpu_custom_call.1} parent=11 // pred_fallthru
          _
        // Predicated region
        $region37: #{tpu_custom_call.1} parent=11 // pred_check
          %p278 = pneg %p167
        $region38: #{tpu_custom_call.1} parent=11 // pred_check_branch
          %280 = sbr.rel (%p278) target = $region40
        $region39: #{tpu_custom_call.1} parent=11 // pred_region
          _
        $region40: #{tpu_custom_call.1} parent=11 // pred_fallthru
          _
      $region12: #{tpu_custom_call.1} parent=5 // pred_fallthru
        _
      %p281 = scmp.lt.s32.totalorder %s20, 2
      // Predicated region
      $region41: #{tpu_custom_call.1} parent=5 // pred_check
        %p282 = pneg %p281
      $region42: #{tpu_custom_call.1} parent=5 // pred_check_branch
        %284 = sbr.rel (%p282) target = $region44
      $region43: #{tpu_custom_call.1} parent=5 // pred_region
        // Predicated region
        $region45: #{tpu_custom_call.1} parent=43 // pred_check
          %p285 = pneg %p187
        $region46: #{tpu_custom_call.1} parent=43 // pred_check_branch
          %287 = sbr.rel (%p285) target = $region48
        $region47: #{tpu_custom_call.1} parent=43 // pred_region
          %s288 = smul.u32 8, %s20
          %p289 = scmp.lt.s32.totalorder %s288, 15
          %s290 = scalar_select %p289, %s288, 15
          %s291 = smul.addr %s290, 8
          %s292 = scalar_lea.vmem %s7, %s291
          %s293 = smul.u32 8, %s20
        $region48: #{tpu_custom_call.1} parent=43 // pred_fallthru
          _
        // Predicated region
        $region49: #{tpu_custom_call.1} parent=43 // pred_check
          %p294 = pneg %p213
        $region50: #{tpu_custom_call.1} parent=43 // pred_check_branch
          %296 = sbr.rel (%p294) target = $region52
        $region51: #{tpu_custom_call.1} parent=43 // pred_region
          %s297 = smul.u32 8, %s20
          %p298 = scmp.lt.s32.totalorder %s297, 15
          %s299 = scalar_select %p298, %s297, 15
          %s300 = smul.addr %s299, 8
          %s301 = scalar_lea.vmem %s8, %s300
          %s302 = smul.u32 8, %s20
        $region52: #{tpu_custom_call.1} parent=43 // pred_fallthru
          _
      $region44: #{tpu_custom_call.1} parent=5 // pred_fallthru
        _
      %p303 = scmp.le.s32.totalorder 1, %s20
      %p304 = scmp.lt.s32.totalorder %s20, 3
      %p305 = pnand %p303, %p304
      %p306 = pneg %p305
      // Predicated region
      $region53: #{tpu_custom_call.1} parent=5 // pred_check
        _
      $region54: #{tpu_custom_call.1} parent=5 // pred_check_branch
        %308 = sbr.rel (%p305) target = $region56
      $region55: #{tpu_custom_call.1} parent=5 // pred_region
        %s309 = ssub.s32 %s20, 1
        %p310 = pneg %p41
        %p311 = pneg %p38
        %p312 = pneg %p62
        %p313 = pneg %p59
        %p314 = pneg %p83
        %p315 = pneg %p80
        %p316 = pneg %p104
        %p317 = pneg %p101
        %p318 = pneg %p125
        %p319 = pneg %p122
        %p320 = pneg %p146
        %p321 = pneg %p143
        %p322 = pneg %p167
        %p323 = pneg %p164
        %s324 = smul.u32 8, %s25
        %p325 = scmp.lt.s32.totalorder %s324, 15
        %s326 = scalar_select %p325, %s324, 15
        %s327 = smul.addr %s326, 8
        %s328 = scalar_lea.vmem %s7, %s327
        %p329 = pneg %p193
        %p330 = pneg %p190
        %s331 = smul.u32 8, %s25
        %p332 = scmp.lt.s32.totalorder %s331, 15
        %s333 = scalar_select %p332, %s331, 15
        %s334 = smul.addr %s333, 8
        %s335 = scalar_lea.vmem %s8, %s334
        %p336 = pneg %p219
        %p337 = pneg %p216
        %p338 = pneg %p245
        %p339 = pneg %p242
        %s340 = sand.u32 %s232, 1
        %s341 = scalar_lea.sflag [#allocation5], %s340
        %s342 = sand.u32 %s232, 1
        %s343 = smul.addr %s342, 64
        %s344 = scalar_lea.vmem [#allocation4], %s343
        %s345 = smul.u32 8, %s25
        %p346 = scmp.lt.s32.totalorder %s345, 15
        %s347 = scalar_select %p346, %s345, 15
        %s348 = smul.addr %s347, 8
        %s349 = scalar_lea.vmem %s7, %s348
        %s350 = smul.u32 8, %s25
        %s351 = smul.u32 8, %s25
        %p352 = scmp.lt.s32.totalorder %s351, 15
        %s353 = scalar_select %p352, %s351, 15
        %s354 = smul.addr %s353, 8
        %s355 = scalar_lea.vmem %s8, %s354
        %s356 = smul.u32 8, %s25
        %s357 = smul.u32 8, %s25
        %v358 = vld [vmem:[%s0] sm:$0xff]
        %v359 = vld [vmem:[%s1] sm:$0xff]
        %v360 = vld [vmem:[%s1 + $0x8] sm:$0xff]
        %v361 = vld [vmem:[%s1 + $0x10] sm:$0xff]
        %v362 = vld [vmem:[%s1 + $0x18] sm:$0xff]
        %v363 = vld [vmem:[%s2] sm:$0x1]
        %v365 = vlaneseq
        %v366 = vshrl.u32 %v365, 7
        %v367 = vsub.s32 0, %v366
        %v368 = vrot.slane %v363, %v367
        %vm370 = vcmask 261120
        %v372 = vsel %vm370, %v358, 0
        %374 = vmatprep.subr.mxu0 0.0
        %375 = vmatpush1.msra.mxu0 %v359
        %376 = vmatprep.subr.mxu0 0.0
        %377 = vmatpush1.msra.mxu0 %v360
        %378 = vmatprep.subr.mxu0 0.0
        %379 = vmatpush1.msra.mxu0 %v361
        %380 = vmatprep.subr.mxu0 0.0
        %381 = vmatpush1.msra.mxu0 %v362
        %382 = vmatprep.subr.mxu0 0.0
        %383 = vmatpush1.msra.mxu0 0.0
        %384 = vmatprep.subr.mxu0 0.0
        %385 = vmatpush1.msra.mxu0 0.0
        %386 = vmatprep.subr.mxu0 0.0
        %387 = vmatpush1.msra.mxu0 0.0
        %388 = vmatprep.subr.mxu0 0.0
        %389 = vmatpush1.msra.mxu0 0.0
        %390 = vmatprep.subr.mxu0 0.0
        %391 = vmatpush1.msra.mxu0 0.0
        %392 = vmatprep.subr.mxu0 0.0
        %393 = vmatpush1.msra.mxu0 0.0
        %394 = vmatprep.subr.mxu0 0.0
        %395 = vmatpush1.msra.mxu0 0.0
        %396 = vmatprep.subr.mxu0 0.0
        %397 = vmatpush1.msra.mxu0 0.0
        %398 = vmatprep.subr.mxu0 0.0
        %399 = vmatpush1.msra.mxu0 0.0
        %400 = vmatprep.subr.mxu0 0.0
        %401 = vmatpush1.msra.mxu0 0.0
        %402 = vmatprep.subr.mxu0 0.0
        %403 = vmatpush1.msra.mxu0 0.0
        %404 = vmatprep.subr.mxu0 0.0
        %405 = vmatpush1.msra.mxu0 0.0
        %406 = vmatprep.subr.mxu0 0.0
        %407 = vmatpush1.msra.mxu0 0.0
        %408 = vmatprep.subr.mxu0 0.0
        %409 = vmatpush1.msra.mxu0 0.0
        %410 = vmatprep.subr.mxu0 0.0
        %411 = vmatpush1.msra.mxu0 0.0
        %412 = vmatprep.subr.mxu0 0.0
        %413 = vmatpush1.msra.mxu0 0.0
        %414 = vmatprep.subr.mxu0 0.0
        %415 = vmatpush1.msra.mxu0 0.0
        %416 = vmatprep.subr.mxu0 0.0
        %417 = vmatpush1.msra.mxu0 0.0
        %418 = vmatprep.subr.mxu0 0.0
        %419 = vmatpush1.msra.mxu0 0.0
        %420 = vmatprep.subr.mxu0 0.0
        %421 = vmatpush1.msra.mxu0 0.0
        %422 = vmatprep.subr.mxu0 0.0
        %423 = vmatpush1.msra.mxu0 0.0
        %424 = vmatprep.subr.mxu0 0.0
        %425 = vmatpush1.msra.mxu0 0.0
        %426 = vmatprep.subr.mxu0 0.0
        %427 = vmatpush1.msra.mxu0 0.0
        %428 = vmatprep.subr.mxu0 0.0
        %429 = vmatpush1.msra.mxu0 0.0
        %430 = vmatprep.subr.mxu0 0.0
        %431 = vmatpush1.msra.mxu0 0.0
        %432 = vmatprep.subr.mxu0 0.0
        %433 = vmatpush1.msra.mxu0 0.0
        %434 = vmatprep.subr.mxu0 0.0
        %435 = vmatpush1.msra.mxu0 0.0
        %436 = vmatprep.subr.mxu0 0.0
        %437 = vmatpush1.msra.mxu0 0.0
        %438 = vmatprep.mubr.f32.mxu0 0.0
        %439 = vmatmul.mubr.f32.gmra.mrb[0].mxu0 %v372
        %v440 = vpop.f32.mrb[0].mxu0
        %v441 = vadd.f32 %v368, %v440
        %v442 = vpop.f32.mrb[0].mxu0
        %443 = vdwg.mxu0
        %v444 = vmax.f32 %v441, 0.0
        %vm445 = vcmask 408576
        %446 = vst.msk [vmem:[#allocation2] sm:$0xff] %vm445, %v444
        %447 = vst.msk [vmem:[#allocation2 + $0x8] sm:$0xff] %vm445, %v444
        %448 = vst.msk [vmem:[#allocation2 + $0x10] sm:$0xff] %vm445, %v444
        %449 = vst.msk [vmem:[#allocation2 + $0x18] sm:$0xff] %vm445, %v444
        %450 = vst.msk [vmem:[#allocation2 + $0x20] sm:$0xff] %vm445, %v444
        %451 = vst.msk [vmem:[#allocation2 + $0x28] sm:$0xff] %vm445, %v444
        %452 = vst.msk [vmem:[#allocation2 + $0x30] sm:$0xff] %vm445, %v444
        %453 = vst.msk [vmem:[#allocation2 + $0x38] sm:$0xff] %vm445, %v444
        %v454 = vld [vmem:[#allocation2] sm:$0xff]
        %v455 = vld [vmem:[#allocation2 + $0x8] sm:$0xff]
        %v456 = vld [vmem:[#allocation2 + $0x10] sm:$0xff]
        %v457 = vld [vmem:[#allocation2 + $0x18] sm:$0xff]
        %v458 = vld [vmem:[#allocation2 + $0x20] sm:$0xff]
        %v459 = vld [vmem:[#allocation2 + $0x28] sm:$0xff]
        %v460 = vld [vmem:[#allocation2 + $0x30] sm:$0xff]
        %v461 = vld [vmem:[#allocation2 + $0x38] sm:$0xff]
        %v462 = vld [vmem:[%s349] sm:$0xff]
        %v463 = vld [vmem:[%s349 + $0x8] sm:$0xff]
        %v464 = vld [vmem:[%s349 + $0x10] sm:$0xff]
        %v465 = vld [vmem:[%s349 + $0x18] sm:$0xff]
        %v466 = vld [vmem:[%s349 + $0x20] sm:$0xff]
        %v467 = vld [vmem:[%s349 + $0x28] sm:$0xff]
        %v468 = vld [vmem:[%s349 + $0x30] sm:$0xff]
        %v469 = vld [vmem:[%s349 + $0x38] sm:$0xff]
        %vm470 = vcmp.lt.s32.totalorder %v462, 1503238553
        %vm471 = vcmp.lt.s32.totalorder %v463, 1503238553
        %vm472 = vcmp.lt.s32.totalorder %v464, 1503238553
        %vm473 = vcmp.lt.s32.totalorder %v465, 1503238553
        %vm474 = vcmp.lt.s32.totalorder %v466, 1503238553
        %vm475 = vcmp.lt.s32.totalorder %v467, 1503238553
        %vm476 = vcmp.lt.s32.totalorder %v468, 1503238553
        %vm477 = vcmp.lt.s32.totalorder %v469, 1503238553
        %v478 = vsel %vm470, %v454, 0.0
        %v479 = vsel %vm471, %v455, 0.0
        %v480 = vsel %vm472, %v456, 0.0
        %v481 = vsel %vm473, %v457, 0.0
        %v482 = vsel %vm474, %v458, 0.0
        %v483 = vsel %vm475, %v459, 0.0
        %v484 = vsel %vm476, %v460, 0.0
        %v485 = vsel %vm477, %v461, 0.0
        %v486 = vld [vmem:[%s3] sm:$0xff]
        %v487 = vld [vmem:[%s3 + $0x8] sm:$0xff]
        %v488 = vld [vmem:[%s3 + $0x10] sm:$0xff]
        %v489 = vld [vmem:[%s3 + $0x18] sm:$0xff]
        %v490 = vld [vmem:[%s3 + $0x20] sm:$0xff]
        %v491 = vld [vmem:[%s3 + $0x28] sm:$0xff]
        %v492 = vld [vmem:[%s3 + $0x30] sm:$0x3]
        %v493 = vld [vmem:[%s4] sm:$0x1]
        %v495 = vlaneseq
        %v496 = vshrl.u32 %v495, 7
        %v497 = vsub.s32 0, %v496
        %v498 = vrot.slane %v493, %v497
        %v501 = vsel %vm445, %v478, 0
        %v504 = vsel %vm445, %v479, 0
        %v507 = vsel %vm445, %v480, 0
        %v510 = vsel %vm445, %v481, 0
        %v513 = vsel %vm445, %v482, 0
        %v516 = vsel %vm445, %v483, 0
        %v519 = vsel %vm445, %v484, 0
        %v522 = vsel %vm445, %v485, 0
        %vm524 = vcmask 1041408
        %v526 = vsel %vm524, %v492, 0
        %528 = vmatprep.subr.mxu0 0.0
        %529 = vmatpush1.msra.mxu0 %v486
        %530 = vmatprep.subr.mxu0 0.0
        %531 = vmatpush1.msra.mxu0 %v487
        %532 = vmatprep.subr.mxu0 0.0
        %533 = vmatpush1.msra.mxu0 %v488
        %534 = vmatprep.subr.mxu0 0.0
        %535 = vmatpush1.msra.mxu0 %v489
        %536 = vmatprep.subr.mxu0 0.0
        %537 = vmatpush1.msra.mxu0 %v490
        %538 = vmatprep.subr.mxu0 0.0
        %539 = vmatpush1.msra.mxu0 %v491
        %540 = vmatprep.subr.mxu0 0.0
        %541 = vmatpush1.msra.mxu0 %v526
        %542 = vmatprep.subr.mxu0 0.0
        %543 = vmatpush1.msra.mxu0 0.0
        %544 = vmatprep.subr.mxu0 0.0
        %545 = vmatpush1.msra.mxu0 0.0
        %546 = vmatprep.subr.mxu0 0.0
        %547 = vmatpush1.msra.mxu0 0.0
        %548 = vmatprep.subr.mxu0 0.0
        %549 = vmatpush1.msra.mxu0 0.0
        %550 = vmatprep.subr.mxu0 0.0
        %551 = vmatpush1.msra.mxu0 0.0
        %552 = vmatprep.subr.mxu0 0.0
        %553 = vmatpush1.msra.mxu0 0.0
        %554 = vmatprep.subr.mxu0 0.0
        %555 = vmatpush1.msra.mxu0 0.0
        %556 = vmatprep.subr.mxu0 0.0
        %557 = vmatpush1.msra.mxu0 0.0
        %558 = vmatprep.subr.mxu0 0.0
        %559 = vmatpush1.msra.mxu0 0.0
        %560 = vmatprep.subr.mxu0 0.0
        %561 = vmatpush1.msra.mxu0 0.0
        %562 = vmatprep.subr.mxu0 0.0
        %563 = vmatpush1.msra.mxu0 0.0
        %564 = vmatprep.subr.mxu0 0.0
        %565 = vmatpush1.msra.mxu0 0.0
        %566 = vmatprep.subr.mxu0 0.0
        %567 = vmatpush1.msra.mxu0 0.0
        %568 = vmatprep.subr.mxu0 0.0
        %569 = vmatpush1.msra.mxu0 0.0
        %570 = vmatprep.subr.mxu0 0.0
        %571 = vmatpush1.msra.mxu0 0.0
        %572 = vmatprep.subr.mxu0 0.0
        %573 = vmatpush1.msra.mxu0 0.0
        %574 = vmatprep.subr.mxu0 0.0
        %575 = vmatpush1.msra.mxu0 0.0
        %576 = vmatprep.subr.mxu0 0.0
        %577 = vmatpush1.msra.mxu0 0.0
        %578 = vmatprep.subr.mxu0 0.0
        %579 = vmatpush1.msra.mxu0 0.0
        %580 = vmatprep.subr.mxu0 0.0
        %581 = vmatpush1.msra.mxu0 0.0
        %582 = vmatprep.subr.mxu0 0.0
        %583 = vmatpush1.msra.mxu0 0.0
        %584 = vmatprep.subr.mxu0 0.0
        %585 = vmatpush1.msra.mxu0 0.0
        %586 = vmatprep.subr.mxu0 0.0
        %587 = vmatpush1.msra.mxu0 0.0
        %588 = vmatprep.subr.mxu0 0.0
        %589 = vmatpush1.msra.mxu0 0.0
        %590 = vmatprep.subr.mxu0 0.0
        %591 = vmatpush1.msra.mxu0 0.0
        %592 = vmatprep.mubr.f32.mxu0 0.0
        %593 = vmatmul.mubr.f32.gmra.mrb[0].mxu0 %v501
        %v594 = vpop.f32.mrb[0].mxu0
        %v595 = vadd.f32 %v498, %v594
        %v596 = vpop.f32.mrb[0].mxu0
        %597 = vmatprep.mubr.f32.mxu0 0.0
        %598 = vmatmul.mubr.f32.gmra.mrb[0].mxu0 %v504
        %v599 = vpop.f32.mrb[0].mxu0
        %v600 = vadd.f32 %v498, %v599
        %v601 = vpop.f32.mrb[0].mxu0
        %602 = vmatprep.mubr.f32.mxu0 0.0
        %603 = vmatmul.mubr.f32.gmra.mrb[0].mxu0 %v507
        %v604 = vpop.f32.mrb[0].mxu0
        %v605 = vadd.f32 %v498, %v604
        %v606 = vpop.f32.mrb[0].mxu0
        %607 = vmatprep.mubr.f32.mxu0 0.0
        %608 = vmatmul.mubr.f32.gmra.mrb[0].mxu0 %v510
        %v609 = vpop.f32.mrb[0].mxu0
        %v610 = vadd.f32 %v498, %v609
        %v611 = vpop.f32.mrb[0].mxu0
        %612 = vmatprep.mubr.f32.mxu0 0.0
        %613 = vmatmul.mubr.f32.gmra.mrb[0].mxu0 %v513
        %v614 = vpop.f32.mrb[0].mxu0
        %v615 = vadd.f32 %v498, %v614
        %v616 = vpop.f32.mrb[0].mxu0
        %617 = vmatprep.mubr.f32.mxu0 0.0
        %618 = vmatmul.mubr.f32.gmra.mrb[0].mxu0 %v516
        %v619 = vpop.f32.mrb[0].mxu0
        %v620 = vadd.f32 %v498, %v619
        %v621 = vpop.f32.mrb[0].mxu0
        %622 = vmatprep.mubr.f32.mxu0 0.0
        %623 = vmatmul.mubr.f32.gmra.mrb[0].mxu0 %v519
        %v624 = vpop.f32.mrb[0].mxu0
        %v625 = vadd.f32 %v498, %v624
        %v626 = vpop.f32.mrb[0].mxu0
        %627 = vmatprep.mubr.f32.mxu0 0.0
        %628 = vmatmul.mubr.f32.gmra.mrb[0].mxu0 %v522
        %v629 = vpop.f32.mrb[0].mxu0
        %v630 = vadd.f32 %v498, %v629
        %v631 = vpop.f32.mrb[0].mxu0
        %632 = vdwg.mxu0
        %v633 = vmax.f32 %v595, 0.0
        %v634 = vmax.f32 %v600, 0.0
        %v635 = vmax.f32 %v605, 0.0
        %v636 = vmax.f32 %v610, 0.0
        %v637 = vmax.f32 %v615, 0.0
        %v638 = vmax.f32 %v620, 0.0
        %v639 = vmax.f32 %v625, 0.0
        %v640 = vmax.f32 %v630, 0.0
        %v641 = vld [vmem:[%s355] sm:$0xff]
        %v642 = vld [vmem:[%s355 + $0x8] sm:$0xff]
        %v643 = vld [vmem:[%s355 + $0x10] sm:$0xff]
        %v644 = vld [vmem:[%s355 + $0x18] sm:$0xff]
        %v645 = vld [vmem:[%s355 + $0x20] sm:$0xff]
        %v646 = vld [vmem:[%s355 + $0x28] sm:$0xff]
        %v647 = vld [vmem:[%s355 + $0x30] sm:$0xff]
        %v648 = vld [vmem:[%s355 + $0x38] sm:$0xff]
        %vm649 = vcmp.lt.s32.totalorder %v641, 1503238553
        %vm650 = vcmp.lt.s32.totalorder %v642, 1503238553
        %vm651 = vcmp.lt.s32.totalorder %v643, 1503238553
        %vm652 = vcmp.lt.s32.totalorder %v644, 1503238553
        %vm653 = vcmp.lt.s32.totalorder %v645, 1503238553
        %vm654 = vcmp.lt.s32.totalorder %v646, 1503238553
        %vm655 = vcmp.lt.s32.totalorder %v647, 1503238553
        %vm656 = vcmp.lt.s32.totalorder %v648, 1503238553
        %v657 = vsel %vm649, %v633, 0.0
        %v658 = vsel %vm650, %v634, 0.0
        %v659 = vsel %vm651, %v635, 0.0
        %v660 = vsel %vm652, %v636, 0.0
        %v661 = vsel %vm653, %v637, 0.0
        %v662 = vsel %vm654, %v638, 0.0
        %v663 = vsel %vm655, %v639, 0.0
        %v664 = vsel %vm656, %v640, 0.0
        %v665 = vld [vmem:[%s5] sm:$0x1]
        %v667 = vlaneseq
        %v668 = vshrl.u32 %v667, 7
        %v669 = vsub.s32 0, %v668
        %v670 = vrot.slane %v665, %v669
        %v672 = vmul.f32 %v657, %v670
        %v673 = vmul.f32 %v658, %v670
        %v674 = vmul.f32 %v659, %v670
        %v675 = vmul.f32 %v660, %v670
        %v676 = vmul.f32 %v661, %v670
        %v677 = vmul.f32 %v662, %v670
        %v678 = vmul.f32 %v663, %v670
        %v679 = vmul.f32 %v664, %v670
        %vm680 = vcmask 162816
        %v681 = vsel %vm680, %v672, 0.0
        %682 = vadd.xlane.f32.xlu0 %v681
        %v683 = vpop.xlane.xlu0 %682
        %v684 = vsel %vm680, %v673, 0.0
        %685 = vadd.xlane.f32.xlu0 %v684
        %v686 = vpop.xlane.xlu0 %685
        %v687 = vsel %vm680, %v674, 0.0
        %688 = vadd.xlane.f32.xlu0 %v687
        %v689 = vpop.xlane.xlu0 %688
        %v690 = vsel %vm680, %v675, 0.0
        %691 = vadd.xlane.f32.xlu0 %v690
        %v692 = vpop.xlane.xlu0 %691
        %v693 = vsel %vm680, %v676, 0.0
        %694 = vadd.xlane.f32.xlu0 %v693
        %v695 = vpop.xlane.xlu0 %694
        %v696 = vsel %vm680, %v677, 0.0
        %697 = vadd.xlane.f32.xlu0 %v696
        %v698 = vpop.xlane.xlu0 %697
        %v699 = vsel %vm680, %v678, 0.0
        %700 = vadd.xlane.f32.xlu0 %v699
        %v701 = vpop.xlane.xlu0 %700
        %v702 = vsel %vm680, %v679, 0.0
        %703 = vadd.xlane.f32.xlu0 %v702
        %v704 = vpop.xlane.xlu0 %703
        %v705 = vld [vmem:[#allocation3] sm:$0x1]
        %v707 = vlaneseq
        %v708 = vshrl.u32 %v707, 7
        %v709 = vsub.s32 0, %v708
        %v710 = vrot.slane %v705, %v709
        %v712 = vadd.f32 %v683, %v710
        %v713 = vadd.f32 %v686, %v710
        %v714 = vadd.f32 %v689, %v710
        %v715 = vadd.f32 %v692, %v710
        %v716 = vadd.f32 %v695, %v710
        %v717 = vadd.f32 %v698, %v710
        %v718 = vadd.f32 %v701, %v710
        %v719 = vadd.f32 %v704, %v710
        %v720 = vsub.f32 0.0, %v712
        %v721 = vsub.f32 0.0, %v713
        %v722 = vsub.f32 0.0, %v714
        %v723 = vsub.f32 0.0, %v715
        %v724 = vsub.f32 0.0, %v716
        %v725 = vsub.f32 0.0, %v717
        %v726 = vsub.f32 0.0, %v718
        %v727 = vsub.f32 0.0, %v719
        %v728 = vmul.f32 %v720, 1.442695
        %v729 = vpow.pop %v728
        %v730 = vmul.f32 %v721, 1.442695
        %v731 = vpow.pop %v730
        %v732 = vmul.f32 %v722, 1.442695
        %v733 = vpow.pop %v732
        %v734 = vmul.f32 %v723, 1.442695
        %v735 = vpow.pop %v734
        %v736 = vmul.f32 %v724, 1.442695
        %v737 = vpow.pop %v736
        %v738 = vmul.f32 %v725, 1.442695
        %v739 = vpow.pop %v738
        %v740 = vmul.f32 %v726, 1.442695
        %v741 = vpow.pop %v740
        %v742 = vmul.f32 %v727, 1.442695
        %v743 = vpow.pop %v742
        %v744 = vadd.f32 %v729, 1.0
        %v745 = vadd.f32 %v731, 1.0
        %v746 = vadd.f32 %v733, 1.0
        %v747 = vadd.f32 %v735, 1.0
        %v748 = vadd.f32 %v737, 1.0
        %v749 = vadd.f32 %v739, 1.0
        %v750 = vadd.f32 %v741, 1.0
        %v751 = vadd.f32 %v743, 1.0
        %v752 = vrcp.pop %v744
        %v753 = vrcp.pop %v745
        %v754 = vrcp.pop %v746
        %v755 = vrcp.pop %v747
        %v756 = vrcp.pop %v748
        %v757 = vrcp.pop %v749
        %v758 = vrcp.pop %v750
        %v759 = vrcp.pop %v751
        %v760 = vsub.f32 1.0, %v752
        %v761 = vsub.f32 1.0, %v753
        %v762 = vsub.f32 1.0, %v754
        %v763 = vsub.f32 1.0, %v755
        %v764 = vsub.f32 1.0, %v756
        %v765 = vsub.f32 1.0, %v757
        %v766 = vsub.f32 1.0, %v758
        %v767 = vsub.f32 1.0, %v759
        %v768 = vlaneseq
        %v769 = vand.u32 %v768, 127
        %vm770 = vcmp.eq.s32.totalorder %v769, 0
        %772 = vset.pattern.permute.xlu0 0
        %773 = vperm.xlu0 %772, %v760
        %v774 = vpop.permute.xlu0 %773
        %777 = vset.pattern.permute.xlu0 0
        %778 = vperm.xlu0 %777, %v761
        %v779 = vpop.permute.xlu0 %778
        %782 = vset.pattern.permute.xlu0 0
        %783 = vperm.xlu0 %782, %v762
        %v784 = vpop.permute.xlu0 %783
        %787 = vset.pattern.permute.xlu0 0
        %788 = vperm.xlu0 %787, %v763
        %v789 = vpop.permute.xlu0 %788
        %792 = vset.pattern.permute.xlu0 0
        %793 = vperm.xlu0 %792, %v764
        %v794 = vpop.permute.xlu0 %793
        %797 = vset.pattern.permute.xlu0 0
        %798 = vperm.xlu0 %797, %v765
        %v799 = vpop.permute.xlu0 %798
        %802 = vset.pattern.permute.xlu0 0
        %803 = vperm.xlu0 %802, %v766
        %v804 = vpop.permute.xlu0 %803
        %807 = vset.pattern.permute.xlu0 0
        %808 = vperm.xlu0 %807, %v767
        %v809 = vpop.permute.xlu0 %808
        %812 = vset.pattern.permute.xlu0 0
        %813 = vperm.xlu0 %812, %v752
        %v814 = vpop.permute.xlu0 %813
        %817 = vset.pattern.permute.xlu0 0
        %818 = vperm.xlu0 %817, %v753
        %v819 = vpop.permute.xlu0 %818
        %822 = vset.pattern.permute.xlu0 0
        %823 = vperm.xlu0 %822, %v754
        %v824 = vpop.permute.xlu0 %823
        %827 = vset.pattern.permute.xlu0 0
        %828 = vperm.xlu0 %827, %v755
        %v829 = vpop.permute.xlu0 %828
        %832 = vset.pattern.permute.xlu0 0
        %833 = vperm.xlu0 %832, %v756
        %v834 = vpop.permute.xlu0 %833
        %837 = vset.pattern.permute.xlu0 0
        %838 = vperm.xlu0 %837, %v757
        %v839 = vpop.permute.xlu0 %838
        %842 = vset.pattern.permute.xlu0 0
        %843 = vperm.xlu0 %842, %v758
        %v844 = vpop.permute.xlu0 %843
        %847 = vset.pattern.permute.xlu0 0
        %848 = vperm.xlu0 %847, %v759
        %v849 = vpop.permute.xlu0 %848
        %v851 = vsel %vm770, %v774, %v814
        %v852 = vsel %vm770, %v779, %v819
        %v853 = vsel %vm770, %v784, %v824
        %v854 = vsel %vm770, %v789, %v829
        %v855 = vsel %vm770, %v794, %v834
        %v856 = vsel %vm770, %v799, %v839
        %v857 = vsel %vm770, %v804, %v844
        %v858 = vsel %vm770, %v809, %v849
        %859 = vst [vmem:[%s344] sm:$0xff] %v851
        %860 = vst [vmem:[%s344 + $0x8] sm:$0xff] %v852
        %861 = vst [vmem:[%s344 + $0x10] sm:$0xff] %v853
        %862 = vst [vmem:[%s344 + $0x18] sm:$0xff] %v854
        %863 = vst [vmem:[%s344 + $0x20] sm:$0xff] %v855
        %864 = vst [vmem:[%s344 + $0x28] sm:$0xff] %v856
        %865 = vst [vmem:[%s344 + $0x30] sm:$0xff] %v857
        %866 = vst [vmem:[%s344 + $0x38] sm:$0xff] %v858
        %s867 = sand.u32 %s232, 1
        %s868 = scalar_lea.sflag [#allocation5], %s867
        %s869 = sand.u32 %s232, 1
        %s870 = smul.addr %s869, 64
        %s871 = scalar_lea.vmem [#allocation4], %s870
        // Predicated region
        $region57: #{tpu_custom_call.1} parent=55 // pred_check
          %p872 = pneg %p242
        $region58: #{tpu_custom_call.1} parent=55 // pred_check_branch
          %874 = sbr.rel (%p872) target = $region60
        $region59: #{tpu_custom_call.1} parent=55 // pred_region
          %s875 = smul.u32 8, %s25
          %s877 = ssub.s32 1024, 1024
          %878 = vsyncadd %s868, %s877
          %s879 = smul.addr %s875, 128
          %s880 = scalar_lea.hbm %s9, %s879
          %s881 = sshll.u32 %s871, 4
          %s882 = int_to_ptr.vmem [resolvable:$true] %s881
          %887 = dma.vmem_to_hbm [thread:$0]  %s882, 1024, %s880, %s868, 128, 128, 8
        $region60: #{tpu_custom_call.1} parent=55 // pred_fallthru
          _
      $region56: #{tpu_custom_call.1} parent=5 // pred_fallthru
        _
      %p888 = scmp.le.s32.totalorder 2, %s20
      // Predicated region
      $region61: #{tpu_custom_call.1} parent=5 // pred_check
        %p889 = pneg %p888
      $region62: #{tpu_custom_call.1} parent=5 // pred_check_branch
        %891 = sbr.rel (%p889) target = $region64
      $region63: #{tpu_custom_call.1} parent=5 // pred_region
        %s892 = ssub.s32 %s20, 2
        // Predicated region
        $region65: #{tpu_custom_call.1} parent=63 // pred_check
          %p893 = pneg %p248
        $region66: #{tpu_custom_call.1} parent=63 // pred_check_branch
          %895 = sbr.rel (%p893) target = $region68
        $region67: #{tpu_custom_call.1} parent=63 // pred_region
          %s896 = sand.u32 %s233, 1
          %s897 = scalar_lea.sflag [#allocation5], %s896
          %s898 = sand.u32 %s233, 1
          %s899 = smul.addr %s898, 64
          %s900 = scalar_lea.vmem [#allocation4], %s899
          %901 = dma.done %s897, 1024
        $region68: #{tpu_custom_call.1} parent=63 // pred_fallthru
          _
      $region64: #{tpu_custom_call.1} parent=5 // pred_fallthru
        _
    $region6: #{tpu_custom_call.1} parent=1 // loop_footer
      %s24 = sadd.s32 1, %s20
    $region7: #{tpu_custom_call.1} parent=1 // loop_footer_branch
      %19 = sbr.rel target = $region3
    $region8: #{tpu_custom_call.1} parent=1 // loop_exit
      _
    %902 = vsyncpa [#allocation5], 1
    %s903 = scalar_lea.sflag [#allocation5], 1
    %904 = vsyncpa %s903, 1

</llo_original>
